<compile_context>
chip_gen: v7x
topology: tpu7x:2x2x1
jax: 0.10.0
libtpu: 0.0.40
codegen_flags: <defaults>
</compile_context>

<pallas_src>
import math

import jax
import jax.numpy as jnp
from jax.experimental import pallas as pl
from jax.experimental.pallas import tpu as pltpu


_VMEM_BUDGET_BYTES = 24 << 20     # per-step working set target (headroom under limit)
_VMEM_LIMIT_BYTES = 32 << 20      # explicit scoped limit: > v5e's 16 MiB default,
                                  # < v7x's 64 MiB physical VMEM


def make_positional_encoding(d_model: int, max_len: int, dtype=jnp.float32) -> jnp.ndarray:
    """Build the (max_len, d_model) sinusoidal table exactly as the PyTorch init.

    Do this ONCE at module setup with dtype = activation dtype (e.g. bf16); the
    forward path then performs no per-call cast (saves an HBM read+write pass).
    Trig math itself stays in f32.
    """
    assert d_model % 2 == 0, "sinusoidal PE interleave requires even d_model"
    position = jnp.arange(0, max_len, dtype=jnp.float32)[:, None]             # (max_len, 1)
    div_term = jnp.exp(
        jnp.arange(0, d_model, 2, dtype=jnp.float32) * (-math.log(10000.0) / d_model)
    )                                                                          # (d_model//2,)
    angles = position * div_term                                               # (max_len, d_model//2)
    pe = jnp.zeros((max_len, d_model), dtype=jnp.float32)
    pe = pe.at[:, 0::2].set(jnp.sin(angles))
    pe = pe.at[:, 1::2].set(jnp.cos(angles))
    return pe.astype(dtype)                                                    # (max_len, d_model)


def _round_down(x: int, m: int) -> int:
    return (x // m) * m


def _sublane_packing(dtype) -> int:
    # Packed sublanes per (sub, 128) tile: 8 for 4-byte, 16 for 2-byte, 32 for 1-byte.
    return max(8, 32 // jnp.dtype(dtype).itemsize)


# ---------------------------------------------------------------------------
# Path A: lane-dense flattened view (B, S*D).  Used when D is not 128-aligned
# but S*D is (e.g. small d_model).  Output last dim is a large multiple of 128
# lanes -> unmasked vector stores.
# ---------------------------------------------------------------------------
def _pe_add_kernel_flat(x_ref, pe_ref, o_ref):
    # x_ref / o_ref: (TB, TF) tiles; pe_ref: (1, TF).
    # (1, TF) -> (TB, TF) is a native sublane broadcast inside the VPU add.
    o_ref[...] = x_ref[...] + pe_ref[...]


def _forward_flat(x, pe_table, *, donate_x):
    B, S, D = x.shape
    F = S * D
    itemsize = jnp.dtype(x.dtype).itemsize
    packing = _sublane_packing(x.dtype)

    x2 = x.reshape(B, F)                                  # (B, S*D), lane-dense
    # Table is already in x.dtype (setup-time cast); only a cheap slice+reshape
    # of S*D elements remains here (no-op when S == max_len).
    pe2 = pe_table[:S].reshape(1, F)                      # (1, S*D)

    # Dtype-aware batch tile: keep packed sublane tiles fully dense.
    tb = min(B, packing)

    # Column tile: multiple of 128 lanes, sized so the per-step working set
    # fits the budget.  Accounting (double-buffered):
    #   x:   2 * tb * tf            out: 2 * tb * tf
    #   pe:  2 * packing * tf       ((1, tf) block padded to `packing` sublanes)
    denom = itemsize * (4 * tb + 2 * packing)
    cap = max(128, _round_down(_VMEM_BUDGET_BYTES // denom, 128))
    if F * itemsize >= (2 << 20):
        # Large inputs: keep >= ~8 tiles on the parallel (column) axis so v7x's
        # two TensorCores split the work and the pipeline has steps to overlap,
        # while keeping tiles >= 512 lanes (past the HBM-roofline plateau).
        cap = min(cap, max(512, _round_down(F // 8, 128)))
    tf = min(F, cap)

    # Grid: column tiles OUTER, batch tiles INNER.  The pe block index (0, f)
    # is constant across consecutive inner steps -> Pallas elides the re-DMA.
    grid = (pl.cdiv(F, tf), pl.cdiv(B, tb))

    out2 = pl.pallas_call(
        _pe_add_kernel_flat,
        out_shape=jax.ShapeDtypeStruct((B, F), x.dtype),
        grid_spec=pltpu.PrefetchScalarGridSpec(
            num_scalar_prefetch=0,
            grid=grid,
            in_specs=[
                pl.BlockSpec((tb, tf), lambda f, b: (b, f)),   # x tile
                pl.BlockSpec((1, tf), lambda f, b: (0, f)),    # pe chunk (reused across b)
            ],
            out_specs=pl.BlockSpec((tb, tf), lambda f, b: (b, f)),
        ),
        compiler_params=pltpu.CompilerParams(
            # Column axis "parallel" -> v7x's two TCs split it (no-op on v5e/v6e).
            # Inner (reused) batch axis "arbitrary" preserves pe-DMA elision.
            dimension_semantics=("parallel", "arbitrary"),
            vmem_limit_bytes=_VMEM_LIMIT_BYTES,
        ),
        input_output_aliases=({0: 0} if donate_x else {}),
    )(x2, pe2)

    return out2.reshape(B, S, D)


# ---------------------------------------------------------------------------
# Path B: 3-D tiling (B, S-block, D).  Used when D % 128 == 0 (common
# transformer case; lane-dense already, zero per-call pe prep) and as a
# VMEM-bounded fallback for fully unaligned shapes.
# ---------------------------------------------------------------------------
def _pe_add_kernel_3d(x_ref, pe_ref, o_ref):
    # x_ref / o_ref: (1, TS, D); pe_ref: (TS, D) -> broadcast over the batch dim.
    o_ref[...] = x_ref[...] + pe_ref[...]


def _forward_3d(x, pe_table, *, donate_x):
    B, S, D = x.shape
    max_len = pe_table.shape[0]
    itemsize = jnp.dtype(x.dtype).itemsize
    packing = _sublane_packing(x.dtype)
    row_bytes = D * itemsize

    # Sequence tile: multiple of the packed sublane count, sized to the budget
    # (x + out + pe, each double-buffered ~= 6 * TS * row_bytes).
    ts_cap = max(packing, _round_down(_VMEM_BUDGET_BYTES // (6 * row_bytes), packing))
    if S * row_bytes >= (2 << 20):
        # Keep >= ~8 sequence tiles on the parallel axis for large inputs.
        ts_cap = min(ts_cap, max(packing, _round_down(S // 8, packing)))
    if S >= packing:
        ts = min(ts_cap, _round_down(S, packing))
    else:
        ts = S

    # pe is indexed straight out of the full (max_len, D) table via the
    # index_map -> no per-call slice/cast.  Only exception: tiny unaligned S
    # where the (S, D) pe block would violate the (8, 128) rule unless it
    # equals the full array -> pass a (cheap, S<8) sliced table instead.
    pe_arg = pe_table
    if ts == S and (S % 8 != 0) and (S != max_len):
        pe_arg = pe_table[:S]

    grid = (pl.cdiv(S, ts), B)   # sequence tiles OUTER, batch INNER (pe reuse)

    out = pl.pallas_call(
        _pe_add_kernel_3d,
        out_shape=jax.ShapeDtypeStruct((B, S, D), x.dtype),
        grid_spec=pltpu.PrefetchScalarGridSpec(
            num_scalar_prefetch=0,
            grid=grid,
            in_specs=[
                pl.BlockSpec((1, ts, D), lambda s, b: (b, s, 0)),   # x tile
                pl.BlockSpec((ts, D), lambda s, b: (s, 0)),         # pe rows (reused across b)
            ],
            out_specs=pl.BlockSpec((1, ts, D), lambda s, b: (b, s, 0)),
        ),
        compiler_params=pltpu.CompilerParams(
            dimension_semantics=("parallel", "arbitrary"),
            vmem_limit_bytes=_VMEM_LIMIT_BYTES,
        ),
        input_output_aliases=({0: 0} if donate_x else {}),
    )(x, pe_arg)

    return out


def positional_encoding_forward(
    x: jnp.ndarray,
    pe_table: jnp.ndarray,
    *,
    donate_x: bool = False,
) -> jnp.ndarray:
    """x: (B, S, D); pe_table: (max_len, D) built by make_positional_encoding
    (ideally already in x.dtype).  Returns x + pe[:S] broadcast over batch."""
    B, S, D = x.shape
    if S > pe_table.shape[0]:
        raise ValueError(f"sequence length {S} exceeds max_len {pe_table.shape[0]}")
    if pe_table.dtype != x.dtype:
        # Fallback only; prefer passing a pre-cast table (setup-time) to avoid
        # this per-call HBM read+write.
        pe_table = pe_table.astype(x.dtype)

    if D % 128 != 0 and (S * D) % 128 == 0:
        # Small / unaligned d_model: flatten for lane-dense (unmasked) stores.
        return _forward_flat(x, pe_table, donate_x=donate_x)
    # D 128-aligned (common case) or fully unaligned fallback: bounded 3-D tiling.
    return _forward_3d(x, pe_table, donate_x=donate_x)


if __name__ == "__main__":
    # Small shapes consistent with the module: batch=2, seq=8, d_model=32, max_len=16
    B, S, D, MAX_LEN = 2, 8, 32, 16

    key = jax.random.PRNGKey(0)
    x = jax.random.normal(key, (B, S, D), dtype=jnp.float32)

    # Setup-time table build (+ cast to the activation dtype) — done once.
    pe_table = make_positional_encoding(d_model=D, max_len=MAX_LEN, dtype=x.dtype)

    out = positional_encoding_forward(x, pe_table)
    out = jax.block_until_ready(out)

    # Reference check in plain JAX (matches PyTorch forward semantics).
    ref = x + pe_table[None, :S, :].astype(x.dtype)
    assert out.shape == (B, S, D)
    assert jnp.allclose(out, ref, atol=1e-6), "mismatch vs reference"

    print("KERNEL_OK")
</pallas_src>

<mosaic_0001>
module attributes {stable_mosaic.version = 11 : i64} {
  func.func @_pe_add_kernel_flat(%arg0: i32, %arg1: i32, %arg2: memref<2x256xf32, #tpu.memory_space<vmem>>, %arg3: memref<1x256xf32, #tpu.memory_space<vmem>>, %arg4: memref<2x256xf32, #tpu.memory_space<vmem>>) attributes {dimension_semantics = [#tpu.dimension_semantics<parallel>, #tpu.dimension_semantics<arbitrary>], iteration_bounds = array<i64: 1, 1>, scalar_prefetch = 0 : i64, scratch_operands = 0 : i64, tpu.core_type = #tpu.core_type<tc>, window_params = [{transform_indices = @transform_0, window_bounds = array<i64: 2, 256>}, {transform_indices = @transform_1, window_bounds = array<i64: 1, 256>}, {transform_indices = @transform_2, window_bounds = array<i64: 2, 256>}]} {
    %c0 = arith.constant 0 : index
    %c0_0 = arith.constant 0 : index
    %0 = vector.load %arg2[%c0, %c0_0] : memref<2x256xf32, #tpu.memory_space<vmem>>, vector<2x256xf32>
    %c0_1 = arith.constant 0 : index
    %c0_2 = arith.constant 0 : index
    %1 = vector.load %arg3[%c0_1, %c0_2] : memref<1x256xf32, #tpu.memory_space<vmem>>, vector<1x256xf32>
    %2 = vector.broadcast %1 : vector<1x256xf32> to vector<2x256xf32>
    %3 = arith.addf %0, %2 : vector<2x256xf32>
    %c0_3 = arith.constant 0 : index
    %c0_4 = arith.constant 0 : index
    %4 = vector.load %arg4[%c0_3, %c0_4] : memref<2x256xf32, #tpu.memory_space<vmem>>, vector<2x256xf32>
    tpu.vector_store %arg4[%c0_3, %c0_4], %3 {strides = array<i32>} : memref<2x256xf32, #tpu.memory_space<vmem>>, vector<2x256xf32>,
    return
  }
  func.func @transform_0(%arg0: i32, %arg1: i32) -> (i32, i32) {
    %c0_i32 = arith.constant 0 : i32
    return %arg1, %arg0 : i32, i32
  }
  func.func @transform_1(%arg0: i32, %arg1: i32) -> (i32, i32) {
    %c0_i32 = arith.constant 0 : i32
    %c0_i32_0 = arith.constant 0 : i32
    return %c0_i32, %arg0 : i32, i32
  }
  func.func @transform_2(%arg0: i32, %arg1: i32) -> (i32, i32) {
    %c0_i32 = arith.constant 0 : i32
    return %arg1, %arg0 : i32, i32
  }
}

</mosaic_0001>

<llo_original>
// kernel: tpu_custom_call.1
$region0: #{tpu_custom_call.1}
  #allocation0 [shape = 'u32[]', space=smem, size = 0x4, offset = 0x4, fixed_abs, tag = 'smem constant byte address 0x4 - core index']
  #allocation1 [shape = 'u32[144,128]{1,0:T(1,128)}', space=vmem, size = 0x12000, scoped, tag = 'internal scratch']
  %s0 = inlined_call_operand.hbm [shape: f32[2,256], index: 0, kind: input, shape index: {}]
  %s1 = inlined_call_operand.vmem [shape: f32[1,256], index: 1, kind: input, shape index: {}]
  %s2 = inlined_call_operand.hbm [shape: f32[2,256], index: 2, kind: output, shape index: {}]
  %s3 = sld [smem:[#allocation0]]
  $region22: #{tpu_custom_call.1} parent=0
    _
  %s5 = ssub.s32 1, %s3
  %s6 = scalar_select 0, %s5, %s3
  $region1: #{tpu_custom_call.1} parent=0
    #allocation2 [shape = 'u8[2048]{0}', space=vmem, size = 0x800, scoped, tag = 'input window, operand 0, single buffered']
    #allocation3 [shape = 's32[1]{0}', space=sflag, size = 0x4, scoped, tag = 'scoped memory for tpu_custom_call.1']
    #allocation4 [shape = 's32[1]{0}', space=sflag, size = 0x4, scoped, tag = 'scoped memory for tpu_custom_call.1']
    #allocation5 [shape = 'u8[2048]{0}', space=vmem, size = 0x800, scoped, tag = 'output window, operand 0, single buffered']
    %7 = vsyncpa [#allocation3], 0
    %8 = vsyncpa [#allocation4], 0
    // Predicated region
    $region2: #{tpu_custom_call.1} parent=1 // pred_check
      _
    $region3: #{tpu_custom_call.1} parent=1 // pred_check_branch
      %10 = sbr.rel (0) target = $region5
    $region4: #{tpu_custom_call.1} parent=1 // pred_region
      %s12 = ssub.s32 64, 64
      %13 = vsyncadd [#allocation3], %s12
      %s15 = sshll.u32 [#allocation2], 4
      %s16 = int_to_ptr.vmem [resolvable:$true] %s15
      %18 = dma.hbm_to_vmem [thread:$0]  %s0, 64, %s16, [#allocation3]
    $region5: #{tpu_custom_call.1} parent=1 // pred_fallthru
      _
    // Predicated region
    $region6: #{tpu_custom_call.1} parent=1 // pred_check
      _
    $region7: #{tpu_custom_call.1} parent=1 // pred_check_branch
      %20 = sbr.rel (0) target = $region9
    $region8: #{tpu_custom_call.1} parent=1 // pred_region
      _
    $region9: #{tpu_custom_call.1} parent=1 // pred_fallthru
      _
    // Predicated region
    $region10: #{tpu_custom_call.1} parent=1 // pred_check
      _
    $region11: #{tpu_custom_call.1} parent=1 // pred_check_branch
      %22 = sbr.rel (0) target = $region13
    $region12: #{tpu_custom_call.1} parent=1 // pred_region
      %23 = dma.done [#allocation3], 64
    $region13: #{tpu_custom_call.1} parent=1 // pred_fallthru
      _
    %v24 = vld [vmem:[#allocation2] sm:$0xf]
    %v25 = vld [vmem:[%s1] sm:$0x3]
    %v27 = vlaneseq
    %v28 = vshrl.u32 %v27, 7
    %v29 = vsub.s32 0, %v28
    %v30 = vrot.slane %v25, %v29
    %v31 = vlaneseq
    %v32 = vshrl.u32 %v31, 7
    %v33 = vsub.s32 1, %v32
    %v34 = vrot.slane %v25, %v33
    %v35 = vcombine.low %v30, %v34
    %v37 = vunpack.c.l.s4 1983009808
    %v38 = vunpack.c.0.s8 %v37
    %v39 = vlaneseq
    %v40 = vshrl.u32 %v39, 7
    %v41 = vsub.s32 %v38, %v40
    %v42 = vrot.slane %v35, %v41
    %v44 = vadd.f32 %v24, %v42
    %45 = vst [vmem:[#allocation5] sm:$0xf] %v44
    // Predicated region
    $region14: #{tpu_custom_call.1} parent=1 // pred_check
      _
    $region15: #{tpu_custom_call.1} parent=1 // pred_check_branch
      %47 = sbr.rel (0) target = $region17
    $region16: #{tpu_custom_call.1} parent=1 // pred_region
      %s49 = ssub.s32 64, 64
      %50 = vsyncadd [#allocation4], %s49
      %s52 = sshll.u32 [#allocation5], 4
      %s53 = int_to_ptr.vmem [resolvable:$true] %s52
      %55 = dma.vmem_to_hbm [thread:$0]  %s53, 64, %s2, [#allocation4]
    $region17: #{tpu_custom_call.1} parent=1 // pred_fallthru
      _
    // Predicated region
    $region18: #{tpu_custom_call.1} parent=1 // pred_check
      _
    $region19: #{tpu_custom_call.1} parent=1 // pred_check_branch
      %57 = sbr.rel (0) target = $region21
    $region20: #{tpu_custom_call.1} parent=1 // pred_region
      %58 = dma.done [#allocation4], 64
    $region21: #{tpu_custom_call.1} parent=1 // pred_fallthru
      _
    %59 = vsyncpa [#allocation3], 1
    %60 = vsyncpa [#allocation4], 1

</llo_original>
